<compile_context>
chip_gen: v6e
topology: v6e:2x2x1
jax: 0.10.0
libtpu: 0.0.40
codegen_flags: <defaults>
</compile_context>

<pallas_src>
import functools
import math

import numpy as np
import jax
import jax.numpy as jnp
from jax.experimental import pallas as pl
from jax.experimental.pallas import tpu as pltpu

LANE = 128
_VMEM_LIMIT = 48 * 1024 * 1024          # fits v5e/v6e (128 MiB) and v7x (64 MiB)


def _round_up(x, m):
    return ((x + m - 1) // m) * m


def _row_tile(m):
    """Large sublane-aligned row tile; >=2 grid steps when m is large (v7x megacore)."""
    if m <= 256:
        tm = _round_up(max(m, 1), 8)
        return tm, tm
    tm = 256
    return tm, _round_up(m, tm)


def _apply_act(x, act):
    if act == "relu":
        return jnp.maximum(x, 0.0)
    if act == "leaky":                           # HiFiGAN leaky ReLU, slope 0.1
        return jnp.where(x >= 0.0, x, 0.1 * x)
    if act == "tanh":
        return jnp.tanh(x)
    return x


def _cparams(sem):
    return pltpu.CompilerParams(dimension_semantics=sem,
                                vmem_limit_bytes=_VMEM_LIMIT)


# ----------------------------------------------------------------------------
# Generic fused linear (used by the final lane-major waveform conv)
# ----------------------------------------------------------------------------
def _linear_kernel(x_ref, w_ref, b_ref, o_ref, *, act):
    acc = jnp.dot(x_ref[...].astype(jnp.bfloat16), w_ref[...],
                  preferred_element_type=jnp.float32)
    o_ref[...] = _apply_act(acc + b_ref[...], act)


def pallas_linear(x, w_bf16, b, activation="none"):
    """x:[M,K] f32 @ w:[K,N] bf16 (N multiple of 128) + b:[1,N], fused activation."""
    M, Kd = x.shape
    Np = w_bf16.shape[1]
    TM, Mp = _row_tile(M)
    xp = jnp.pad(x.astype(jnp.float32), ((0, Mp - M), (0, 0)))
    out = pl.pallas_call(
        functools.partial(_linear_kernel, act=activation),
        out_shape=jax.ShapeDtypeStruct((Mp, Np), jnp.float32),
        grid=(Mp // TM,),
        in_specs=[pl.BlockSpec((TM, Kd), lambda i: (i, 0)),
                  pl.BlockSpec((Kd, Np), lambda i: (0, 0)),
                  pl.BlockSpec((1, Np), lambda i: (0, 0))],
        out_specs=pl.BlockSpec((TM, Np), lambda i: (i, 0)),
        compiler_params=_cparams(("parallel",)),
    )(xp, w_bf16, b)
    return out[:M]


# ----------------------------------------------------------------------------
# In-kernel haloed Conv1d on lane-padded (L, 128) activations
# ----------------------------------------------------------------------------
def _conv_kernel(x_ref, w_ref, b_ref, o_ref, *, taps, dil, tm, halo, act):
    base = pl.multiple_of(pl.program_id(0) * tm, 8)
    xt = x_ref[pl.ds(base, tm + halo), :]                   # aligned dynamic slice
    acc = jnp.zeros((tm, o_ref.shape[-1]), jnp.float32)
    for k in range(taps):                                   # K shifted accumulating dots
        xk = xt[k * dil:k * dil + tm, :].astype(jnp.bfloat16)
        acc = acc + jnp.dot(xk, w_ref[k], preferred_element_type=jnp.float32)
    o_ref[...] = _apply_act(acc + b_ref[...], act)


def _conv_res_kernel(x_ref, w_ref, b_ref, res_ref, o_ref, *, taps, dil, tm, halo, act):
    base = pl.multiple_of(pl.program_id(0) * tm, 8)
    xt = x_ref[pl.ds(base, tm + halo), :]
    acc = jnp.zeros((tm, o_ref.shape[-1]), jnp.float32)
    for k in range(taps):
        xk = xt[k * dil:k * dil + tm, :].astype(jnp.bfloat16)
        acc = acc + jnp.dot(xk, w_ref[k], preferred_element_type=jnp.float32)
    o_ref[...] = _apply_act(acc + b_ref[...], act) + res_ref[...]   # fused residual add


def conv1d_lane(x, w_taps, b, *, padding, dilation=1, activation="none",
                residual=None):
    """x:[L,128] (channels lane-padded). w_taps:[K,128,Np] bf16. Returns [Lout,Np] f32."""
    L = x.shape[0]
    K, _, Np = w_taps.shape
    eff = (K - 1) * dilation + 1
    Lout = L + 2 * padding - eff + 1
    TM, Mp = _row_tile(Lout)
    halo = _round_up(eff - 1, 8)
    Lx = Mp + halo
    xp = jnp.pad(x, ((padding, Lx - padding - L), (0, 0)))

    ins = [xp, w_taps, b]
    in_specs = [pl.BlockSpec((Lx, LANE), lambda i: (0, 0)),      # resident, single DMA
                pl.BlockSpec(w_taps.shape, lambda i: (0, 0, 0)),
                pl.BlockSpec((1, Np), lambda i: (0, 0))]
    kern = _conv_kernel
    if residual is not None:
        ins.append(jnp.pad(residual, ((0, Mp - residual.shape[0]), (0, 0))))
        in_specs.append(pl.BlockSpec((TM, Np), lambda i: (i, 0)))
        kern = _conv_res_kernel

    out = pl.pallas_call(
        functools.partial(kern, taps=K, dil=dilation, tm=TM, halo=halo, act=activation),
        out_shape=jax.ShapeDtypeStruct((Mp, Np), jnp.float32),
        grid=(Mp // TM,),
        in_specs=in_specs,
        out_specs=pl.BlockSpec((TM, Np), lambda i: (i, 0)),
        compiler_params=_cparams(("parallel",)),
    )(*ins)
    return out[:Lout]


def upsample4x(x, w_taps, b, activation="leaky"):
    """ConvTranspose1d(K=8, stride=4, pad=2) as a polyphase 2-tap conv (no zero-insertion).
    w_taps fuses the 4 phase filters into a 512-wide output which is de-interleaved
    by a free row-major reshape."""
    L = x.shape[0]
    y = conv1d_lane(x, w_taps, b, padding=1, activation=activation)   # [L+1, 512]
    y = y.reshape((L + 1) * 4, LANE)
    return y[2:2 + 4 * L]


# ----------------------------------------------------------------------------
# Fused FastSpeech2 encoder / decoder kernels
# ----------------------------------------------------------------------------
def _encoder_kernel(ph_ref, wi_ref, bi_ref, utt_ref, wu_ref, bu_ref, lang_ref,
                    wf_ref, bf_ref, wh_ref, bh_ref, h_ref, heads_ref):
    h = jnp.dot(ph_ref[...], wi_ref[...], preferred_element_type=jnp.float32)
    h = jnp.maximum(h + bi_ref[...], 0.0)
    u = jnp.dot(utt_ref[...], wu_ref[...], preferred_element_type=jnp.float32) + bu_ref[...]
    h = h + u + lang_ref[...]
    h = jnp.dot(h, wf_ref[...], preferred_element_type=jnp.float32)
    h = jnp.maximum(h + bf_ref[...], 0.0)
    heads_ref[...] = (jnp.dot(h, wh_ref[...], preferred_element_type=jnp.float32)
                      + bh_ref[...])
    h_ref[...] = h


def fastspeech_encoder(phones, utt, lang_row, p):
    T, _ = phones.shape
    Tp = _round_up(T, 8)
    ph = jnp.pad(phones.astype(jnp.float32), ((0, Tp - T), (0, 0)))

    def full(a):
        return pl.BlockSpec(a.shape, lambda i: (0,) * a.ndim)

    ins = [ph, p["enc_in_w"], p["enc_in_b"], utt, p["utt_w"], p["utt_b"],
           lang_row, p["ff_w"], p["ff_b"], p["head_w"], p["head_b"]]
    h, heads = pl.pallas_call(
        _encoder_kernel,
        out_shape=(jax.ShapeDtypeStruct((Tp, LANE), jnp.float32),
                   jax.ShapeDtypeStruct((Tp, LANE), jnp.float32)),
        grid=(1,),
        in_specs=[full(a) for a in ins],
        out_specs=(pl.BlockSpec((Tp, LANE), lambda i: (0, 0)),
                   pl.BlockSpec((Tp, LANE), lambda i: (0, 0))),
        compiler_params=_cparams(("arbitrary",)),
    )(*ins)
    return h[:T], heads[:T]


def _decoder_kernel(h_ref, var_ref, vw_ref, vb_ref, w1_ref, b1_ref,
                    w2_ref, b2_ref, o_ref):
    h = h_ref[...] + vb_ref[...] + jnp.dot(
        var_ref[...], vw_ref[...], preferred_element_type=jnp.float32)
    d1 = jnp.maximum(
        jnp.dot(h, w1_ref[...], preferred_element_type=jnp.float32) + b1_ref[...], 0.0)
    o_ref[...] = (jnp.dot(d1, w2_ref[...], preferred_element_type=jnp.float32)
                  + b2_ref[...])


def fastspeech_decoder(h_up, var_up, p):
    M = h_up.shape[0]
    TM, Mp = _row_tile(M)
    hp = jnp.pad(h_up, ((0, Mp - M), (0, 0)))
    vp = jnp.pad(var_up, ((0, Mp - M), (0, LANE - var_up.shape[1])))
    row = pl.BlockSpec((TM, LANE), lambda i: (i, 0))

    def cst(a):
        return pl.BlockSpec(a.shape, lambda i: (0,) * a.ndim)

    mel = pl.pallas_call(
        _decoder_kernel,
        out_shape=jax.ShapeDtypeStruct((Mp, LANE), jnp.float32),
        grid=(Mp // TM,),
        in_specs=[row, row, cst(p["var_w"]), cst(p["var_b"]),
                  cst(p["dec1_w"]), cst(p["dec1_b"]),
                  cst(p["dec_out_w"]), cst(p["dec_out_b"])],
        out_specs=row,
        compiler_params=_cparams(("parallel",)),
    )(hp, vp, p["var_w"], p["var_b"], p["dec1_w"], p["dec1_b"],
      p["dec_out_w"], p["dec_out_b"])
    return mel[:M]


# ----------------------------------------------------------------------------
# Synthetic FastSpeech2 + HiFiGAN (small dims), deterministic weights
# ----------------------------------------------------------------------------
class InferenceFastSpeech2Pallas:
    def __init__(self, key, feat_dim=62, hidden=32, utt_dim=64, mel_dim=80,
                 num_langs=8, lang_id=3):
        self.feat_dim, self.hidden, self.mel_dim = feat_dim, hidden, mel_dim
        self.lang_id = lang_id
        H = hidden
        C0, C1, C2 = 32, 16, 8
        self.C0, self.C1, self.C2 = C0, C1, C2

        ks = iter(jax.random.split(key, 64))

        def w(shape, fan_in):
            return np.asarray(jax.random.normal(next(ks), shape, jnp.float32)
                              ) / math.sqrt(fan_in)

        # --- raw synthetic weights (PyTorch layouts) ---
        enc_in_w = w((feat_dim, H), feat_dim)
        utt_proj_w = w((utt_dim, H), utt_dim)
        lang_emb = 0.05 * np.asarray(jax.random.normal(next(ks), (num_langs, H),
                                                       jnp.float32))
        enc_ff_w = w((H, H), H)
        dur_w, pitch_w, energy_w = w((H, 1), H), w((H, 1), H), w((H, 1), H)
        pitch_emb_w, energy_emb_w = w((1, H), 1), w((1, H), 1)
        dec1_w = w((H, H), H)
        dec_out_w = w((H, mel_dim), H)
        pre_w = w((C0, mel_dim, 7), mel_dim * 7)
        up1_w = w((C0, C1, 8), C0 * 8)
        res1a_w = w((C1, C1, 3), C1 * 3)
        res1b_w = w((C1, C1, 3), C1 * 3)
        up2_w = w((C1, C2, 8), C1 * 8)
        res2a_w = w((C2, C2, 3), C2 * 3)
        res2b_w = w((C2, C2, 3), C2 * 3)
        post_w = w((1, C2, 7), C2 * 7)

        # --- FastSpeech2: lane-padded fused weights (built once, not per call) ---
        def pad_cols(a):
            out = np.zeros((a.shape[0], LANE), np.float32)
            out[:, :a.shape[1]] = a
            return out

        def pad_sq(a):
            out = np.zeros((LANE, LANE), np.float32)
            out[:a.shape[0], :a.shape[1]] = a
            return out

        head_w = np.zeros((LANE, LANE), np.float32)          # dur/pitch/energy fused
        head_w[:H, 0] = dur_w[:, 0]
        head_w[:H, 1] = pitch_w[:, 0]
        head_w[:H, 2] = energy_w[:, 0]
        head_b = np.zeros((1, LANE), np.float32)
        head_b[0, 0] = 0.7                                   # duration-predictor bias

        var_w = np.zeros((LANE, LANE), np.float32)           # pitch/energy embeddings fused
        var_w[0, :H] = pitch_emb_w[0]
        var_w[1, :H] = energy_emb_w[0]

        f32 = lambda a: jnp.asarray(a, jnp.float32)
        zb = lambda n: jnp.zeros((1, n), jnp.float32)
        self.fs2 = {
            "enc_in_w": f32(pad_cols(enc_in_w)), "enc_in_b": zb(LANE),
            "utt_w": f32(pad_cols(utt_proj_w)), "utt_b": zb(LANE),
            "lang_emb": f32(pad_cols(lang_emb)),
            "ff_w": f32(pad_sq(enc_ff_w)), "ff_b": zb(LANE),
            "head_w": f32(head_w), "head_b": f32(head_b),
            "var_w": f32(var_w), "var_b": zb(LANE),
            "dec1_w": f32(pad_sq(dec1_w)), "dec1_b": zb(LANE),
            "dec_out_w": f32(pad_sq(dec_out_w)), "dec_out_b": zb(LANE),
        }

        # --- HiFiGAN: bf16 lane-padded conv taps, pre-transposed once ---
        bf16 = lambda a: jnp.asarray(a, jnp.bfloat16)

        def conv_taps(wt):                    # torch Conv1d weight (Cout, Cin, K)
            cout, cin, k = wt.shape
            taps = np.zeros((k, LANE, LANE), np.float32)
            taps[:, :cin, :cout] = np.transpose(wt, (2, 1, 0))
            return bf16(taps)

        def upsample_taps(wt):                # torch ConvTranspose1d weight (Cin, Cout, 8)
            cin, cout, k = wt.shape
            taps = np.zeros((2, LANE, 4 * LANE), np.float32)
            for r in range(4):                # polyphase split, phases fused on lanes
                taps[0, :cin, r * LANE:r * LANE + cout] = wt[:, :, r + 4]
                taps[1, :cin, r * LANE:r * LANE + cout] = wt[:, :, r]
            return bf16(taps)

        # Final Conv1d(C2 -> 1): banded weight so 128 time steps land on the lane axis.
        R, Kp = LANE, 7
        win = R + Kp - 1
        post_band = np.zeros((win * C2, R), np.float32)
        for r in range(R):
            for k in range(Kp):
                rp = r + k
                post_band[rp * C2:(rp + 1) * C2, r] = post_w[0, :, k]

        self.gan = {
            "pre_w": conv_taps(pre_w), "pre_b": zb(LANE),
            "up1_w": upsample_taps(up1_w), "up1_b": zb(4 * LANE),
            "res1a_w": conv_taps(res1a_w), "res1a_b": zb(LANE),
            "res1b_w": conv_taps(res1b_w), "res1b_b": zb(LANE),
            "up2_w": upsample_taps(up2_w), "up2_b": zb(4 * LANE),
            "res2a_w": conv_taps(res2a_w), "res2a_b": zb(LANE),
            "res2b_w": conv_taps(res2b_w), "res2b_b": zb(LANE),
            "post_w": bf16(post_band), "post_b": zb(LANE),
        }

        self.default_utterance_embedding = 0.1 * jax.random.normal(
            next(ks), (utt_dim,), jnp.float32)

    # ---------------- FastSpeech2 ----------------
    def phone2mel(self, phones, durations=None, pitch=None, energy=None):
        p = self.fs2
        T = phones.shape[0]
        utt = self.default_utterance_embedding[None, :].astype(jnp.float32)
        lang_row = p["lang_emb"][self.lang_id][None, :]

        h_enc, heads = fastspeech_encoder(phones, utt, lang_row, p)    # [T,128] x2

        log_dur = heads[:, 0]
        if durations is None:
            durations = jnp.clip(jnp.round(jnp.exp(log_dur)), 1, 6).astype(jnp.int32)
        else:
            durations = jnp.asarray(durations).astype(jnp.int32)
        if pitch is None:
            pitch = heads[:, 1:2]
        if energy is None:
            energy = heads[:, 2:3]

        # Length regulator: pure row gather (no one-hot matmul, no host numpy).
        # TODO(synk): frame count is data-dependent, so one scalar device->host sync
        #             remains to size the gather; the gather itself stays in XLA glue.
        frames = int(jax.device_get(jnp.sum(durations)))
        idx = jnp.repeat(jnp.arange(T, dtype=jnp.int32), durations,
                         total_repeat_length=frames)
        h_up = jnp.take(h_enc, idx, axis=0)                            # [frames,128]
        var_up = jnp.take(jnp.concatenate([pitch, energy], axis=1), idx, axis=0)

        mel = fastspeech_decoder(h_up, var_up, p)                      # [frames,128]
        return mel[:, :self.mel_dim], durations, pitch, energy

    # ---------------- HiFiGAN ----------------
    def mel2wav(self, mel_cf):
        """mel_cf: [80, frames]  (channels-first, as handed over by forward)."""
        g = self.gan
        x = mel_cf.T.astype(jnp.float32)                               # (L, 80)
        x = jnp.pad(x, ((0, 0), (0, LANE - x.shape[1])))               # lane-pad channels

        x = conv1d_lane(x, g["pre_w"], g["pre_b"], padding=3, activation="leaky")

        x = upsample4x(x, g["up1_w"], g["up1_b"], activation="leaky")
        r = conv1d_lane(x, g["res1a_w"], g["res1a_b"], padding=1, activation="leaky")
        x = conv1d_lane(r, g["res1b_w"], g["res1b_b"], padding=1, residual=x)

        x = upsample4x(x, g["up2_w"], g["up2_b"], activation="leaky")
        r = conv1d_lane(x, g["res2a_w"], g["res2a_b"], padding=1, activation="leaky")
        x = conv1d_lane(r, g["res2b_w"], g["res2b_b"], padding=1, residual=x)

        return self._post_conv(x)                                      # [samples]

    def _post_conv(self, x):
        """Final Conv1d(C2 -> 1, K=7, pad=3) + tanh, time mapped to the lane axis."""
        g = self.gan
        C2, K, R = self.C2, 7, LANE
        L = x.shape[0]
        win = R + K - 1
        xr = x[:, :C2]
        mrows = -(-L // R)
        xpad = jnp.pad(xr, ((3, mrows * R + K - 1 - 3 - L), (0, 0)))
        idx = jnp.arange(mrows)[:, None] * R + jnp.arange(win)[None, :]
        patches = xpad[idx].reshape(mrows, win * C2)                   # ~1.05x input bytes
        wave2d = pallas_linear(patches, g["post_w"], g["post_b"], activation="tanh")
        return wave2d.reshape(-1)[:L]

    # ---------------- forward ----------------
    def forward(self, phones, durations=None, pitch=None, energy=None):
        mel, durations, pitch, energy = self.phone2mel(
            phones, durations=durations, pitch=pitch, energy=energy)
        mel = mel.T                       # matches torch: mel.transpose(0, 1) -> [80, frames]
        wave = self.mel2wav(mel)
        # TODO(synk): noisereduce.reduce_noise post-processing not translatable.
        return wave

    __call__ = forward


# ----------------------------------------------------------------------------
if __name__ == "__main__":
    key = jax.random.PRNGKey(0)
    k_model, k_phones = jax.random.split(key)

    T, FEAT = 8, 62                               # 8 phones, 62 articulatory features
    model = InferenceFastSpeech2Pallas(k_model, feat_dim=FEAT, hidden=32,
                                       utt_dim=64, mel_dim=80)

    # TODO(synk): text frontend replaced by a synthetic articulatory-feature tensor.
    phones = jax.random.normal(k_phones, (T, FEAT), jnp.float32)

    wave = model(phones)
    jax.block_until_ready(wave)
    assert wave.ndim == 1 and wave.shape[0] > 0 and bool(jnp.all(jnp.isfinite(wave)))
    print("KERNEL_OK")
</pallas_src>

<mosaic_0001>
module attributes {stable_mosaic.version = 11 : i64} {
  func.func @_encoder_kernel(%arg0: i32, %arg1: memref<8x62xf32, #tpu.memory_space<vmem>>, %arg2: memref<62x128xf32, #tpu.memory_space<vmem>>, %arg3: memref<1x128xf32, #tpu.memory_space<vmem>>, %arg4: memref<1x64xf32, #tpu.memory_space<vmem>>, %arg5: memref<64x128xf32, #tpu.memory_space<vmem>>, %arg6: memref<1x128xf32, #tpu.memory_space<vmem>>, %arg7: memref<1x128xf32, #tpu.memory_space<vmem>>, %arg8: memref<128x128xf32, #tpu.memory_space<vmem>>, %arg9: memref<1x128xf32, #tpu.memory_space<vmem>>, %arg10: memref<128x128xf32, #tpu.memory_space<vmem>>, %arg11: memref<1x128xf32, #tpu.memory_space<vmem>>, %arg12: memref<8x128xf32, #tpu.memory_space<vmem>>, %arg13: memref<8x128xf32, #tpu.memory_space<vmem>>) attributes {dimension_semantics = [#tpu.dimension_semantics<arbitrary>], iteration_bounds = array<i64: 1>, scalar_prefetch = 0 : i64, scratch_operands = 0 : i64, tpu.core_type = #tpu.core_type<tc>, window_params = [{pipeline_mode = #tpu.pipeline_mode<synchronous>, transform_indices = @transform_0, window_bounds = array<i64: 8, 62>}, {pipeline_mode = #tpu.pipeline_mode<synchronous>, transform_indices = @transform_1, window_bounds = array<i64: 62, 128>}, {pipeline_mode = #tpu.pipeline_mode<synchronous>, transform_indices = @transform_2, window_bounds = array<i64: 1, 128>}, {pipeline_mode = #tpu.pipeline_mode<synchronous>, transform_indices = @transform_3, window_bounds = array<i64: 1, 64>}, {pipeline_mode = #tpu.pipeline_mode<synchronous>, transform_indices = @transform_4, window_bounds = array<i64: 64, 128>}, {pipeline_mode = #tpu.pipeline_mode<synchronous>, transform_indices = @transform_5, window_bounds = array<i64: 1, 128>}, {pipeline_mode = #tpu.pipeline_mode<synchronous>, transform_indices = @transform_6, window_bounds = array<i64: 1, 128>}, {pipeline_mode = #tpu.pipeline_mode<synchronous>, transform_indices = @transform_7, window_bounds = array<i64: 128, 128>}, {pipeline_mode = #tpu.pipeline_mode<synchronous>, transform_indices = @transform_8, window_bounds = array<i64: 1, 128>}, {pipeline_mode = #tpu.pipeline_mode<synchronous>, transform_indices = @transform_9, window_bounds = array<i64: 128, 128>}, {pipeline_mode = #tpu.pipeline_mode<synchronous>, transform_indices = @transform_10, window_bounds = array<i64: 1, 128>}, {pipeline_mode = #tpu.pipeline_mode<synchronous>, transform_indices = @transform_11, window_bounds = array<i64: 8, 128>}, {pipeline_mode = #tpu.pipeline_mode<synchronous>, transform_indices = @transform_12, window_bounds = array<i64: 8, 128>}]} {
    %c0 = arith.constant 0 : index
    %c0_0 = arith.constant 0 : index
    %0 = vector.load %arg1[%c0, %c0_0] : memref<8x62xf32, #tpu.memory_space<vmem>>, vector<8x62xf32>
    %c0_1 = arith.constant 0 : index
    %c0_2 = arith.constant 0 : index
    %1 = vector.load %arg2[%c0_1, %c0_2] : memref<62x128xf32, #tpu.memory_space<vmem>>, vector<62x128xf32>
    %cst = arith.constant dense<0.000000e+00> : vector<8x128xf32>
    %2 = tpu.matmul %0, %1, %cst {dimension_numbers = #tpu.dot_dimension_numbers<[1], [0], [0], [1], [0, 0, 1, 1], [], []>} : vector<8x62xf32>, vector<62x128xf32>, vector<8x128xf32> -> vector<8x128xf32>
    %c0_3 = arith.constant 0 : index
    %c0_4 = arith.constant 0 : index
    %3 = vector.load %arg3[%c0_3, %c0_4] : memref<1x128xf32, #tpu.memory_space<vmem>>, vector<1x128xf32>
    %4 = vector.broadcast %3 : vector<1x128xf32> to vector<8x128xf32>
    %5 = arith.addf %2, %4 : vector<8x128xf32>
    %cst_5 = arith.constant 0.000000e+00 : f32
    %6 = vector.broadcast %cst_5 : f32 to vector<8x128xf32>
    %7 = arith.maximumf %5, %6 : vector<8x128xf32>
    %c0_6 = arith.constant 0 : index
    %c0_7 = arith.constant 0 : index
    %8 = vector.load %arg4[%c0_6, %c0_7] : memref<1x64xf32, #tpu.memory_space<vmem>>, vector<1x64xf32>
    %c0_8 = arith.constant 0 : index
    %c0_9 = arith.constant 0 : index
    %9 = vector.load %arg5[%c0_8, %c0_9] : memref<64x128xf32, #tpu.memory_space<vmem>>, vector<64x128xf32>
    %cst_10 = arith.constant dense<0.000000e+00> : vector<1x128xf32>
    %10 = tpu.matmul %8, %9, %cst_10 {dimension_numbers = #tpu.dot_dimension_numbers<[1], [0], [0], [1], [0, 0, 1, 1], [], []>} : vector<1x64xf32>, vector<64x128xf32>, vector<1x128xf32> -> vector<1x128xf32>
    %c0_11 = arith.constant 0 : index
    %c0_12 = arith.constant 0 : index
    %11 = vector.load %arg6[%c0_11, %c0_12] : memref<1x128xf32, #tpu.memory_space<vmem>>, vector<1x128xf32>
    %12 = arith.addf %10, %11 : vector<1x128xf32>
    %13 = vector.broadcast %12 : vector<1x128xf32> to vector<8x128xf32>
    %14 = arith.addf %7, %13 : vector<8x128xf32>
    %c0_13 = arith.constant 0 : index
    %c0_14 = arith.constant 0 : index
    %15 = vector.load %arg7[%c0_13, %c0_14] : memref<1x128xf32, #tpu.memory_space<vmem>>, vector<1x128xf32>
    %16 = vector.broadcast %15 : vector<1x128xf32> to vector<8x128xf32>
    %17 = arith.addf %14, %16 : vector<8x128xf32>
    %c0_15 = arith.constant 0 : index
    %c0_16 = arith.constant 0 : index
    %18 = vector.load %arg8[%c0_15, %c0_16] : memref<128x128xf32, #tpu.memory_space<vmem>>, vector<128x128xf32>
    %cst_17 = arith.constant dense<0.000000e+00> : vector<8x128xf32>
    %19 = tpu.matmul %17, %18, %cst_17 {dimension_numbers = #tpu.dot_dimension_numbers<[1], [0], [0], [1], [0, 0, 1, 1], [], []>} : vector<8x128xf32>, vector<128x128xf32>, vector<8x128xf32> -> vector<8x128xf32>
    %c0_18 = arith.constant 0 : index
    %c0_19 = arith.constant 0 : index
    %20 = vector.load %arg9[%c0_18, %c0_19] : memref<1x128xf32, #tpu.memory_space<vmem>>, vector<1x128xf32>
    %21 = vector.broadcast %20 : vector<1x128xf32> to vector<8x128xf32>
    %22 = arith.addf %19, %21 : vector<8x128xf32>
    %cst_20 = arith.constant 0.000000e+00 : f32
    %23 = vector.broadcast %cst_20 : f32 to vector<8x128xf32>
    %24 = arith.maximumf %22, %23 : vector<8x128xf32>
    %c0_21 = arith.constant 0 : index
    %c0_22 = arith.constant 0 : index
    %25 = vector.load %arg10[%c0_21, %c0_22] : memref<128x128xf32, #tpu.memory_space<vmem>>, vector<128x128xf32>
    %cst_23 = arith.constant dense<0.000000e+00> : vector<8x128xf32>
    %26 = tpu.matmul %24, %25, %cst_23 {dimension_numbers = #tpu.dot_dimension_numbers<[1], [0], [0], [1], [0, 0, 1, 1], [], []>} : vector<8x128xf32>, vector<128x128xf32>, vector<8x128xf32> -> vector<8x128xf32>
    %c0_24 = arith.constant 0 : index
    %c0_25 = arith.constant 0 : index
    %27 = vector.load %arg11[%c0_24, %c0_25] : memref<1x128xf32, #tpu.memory_space<vmem>>, vector<1x128xf32>
    %28 = vector.broadcast %27 : vector<1x128xf32> to vector<8x128xf32>
    %29 = arith.addf %26, %28 : vector<8x128xf32>
    %c0_26 = arith.constant 0 : index
    %c0_27 = arith.constant 0 : index
    %30 = vector.load %arg13[%c0_26, %c0_27] : memref<8x128xf32, #tpu.memory_space<vmem>>, vector<8x128xf32>
    tpu.vector_store %arg13[%c0_26, %c0_27], %29 {strides = array<i32>} : memref<8x128xf32, #tpu.memory_space<vmem>>, vector<8x128xf32>,
    %c0_28 = arith.constant 0 : index
    %c0_29 = arith.constant 0 : index
    %31 = vector.load %arg12[%c0_28, %c0_29] : memref<8x128xf32, #tpu.memory_space<vmem>>, vector<8x128xf32>
    tpu.vector_store %arg12[%c0_28, %c0_29], %24 {strides = array<i32>} : memref<8x128xf32, #tpu.memory_space<vmem>>, vector<8x128xf32>,
    return
  }
  func.func @transform_0(%arg0: i32) -> (i32, i32) {
    %c0_i32 = arith.constant 0 : i32
    %c0_i32_0 = arith.constant 0 : i32
    %c0_i32_1 = arith.constant 0 : i32
    return %c0_i32, %c0_i32_0 : i32, i32
  }
  func.func @transform_1(%arg0: i32) -> (i32, i32) {
    %c0_i32 = arith.constant 0 : i32
    %c0_i32_0 = arith.constant 0 : i32
    %c0_i32_1 = arith.constant 0 : i32
    return %c0_i32, %c0_i32_0 : i32, i32
  }
  func.func @transform_2(%arg0: i32) -> (i32, i32) {
    %c0_i32 = arith.constant 0 : i32
    %c0_i32_0 = arith.constant 0 : i32
    %c0_i32_1 = arith.constant 0 : i32
    return %c0_i32, %c0_i32_0 : i32, i32
  }
  func.func @transform_3(%arg0: i32) -> (i32, i32) {
    %c0_i32 = arith.constant 0 : i32
    %c0_i32_0 = arith.constant 0 : i32
    %c0_i32_1 = arith.constant 0 : i32
    return %c0_i32, %c0_i32_0 : i32, i32
  }
  func.func @transform_4(%arg0: i32) -> (i32, i32) {
    %c0_i32 = arith.constant 0 : i32
    %c0_i32_0 = arith.constant 0 : i32
    %c0_i32_1 = arith.constant 0 : i32
    return %c0_i32, %c0_i32_0 : i32, i32
  }
  func.func @transform_5(%arg0: i32) -> (i32, i32) {
    %c0_i32 = arith.constant 0 : i32
    %c0_i32_0 = arith.constant 0 : i32
    %c0_i32_1 = arith.constant 0 : i32
    return %c0_i32, %c0_i32_0 : i32, i32
  }
  func.func @transform_6(%arg0: i32) -> (i32, i32) {
    %c0_i32 = arith.constant 0 : i32
    %c0_i32_0 = arith.constant 0 : i32
    %c0_i32_1 = arith.constant 0 : i32
    return %c0_i32, %c0_i32_0 : i32, i32
  }
  func.func @transform_7(%arg0: i32) -> (i32, i32) {
    %c0_i32 = arith.constant 0 : i32
    %c0_i32_0 = arith.constant 0 : i32
    %c0_i32_1 = arith.constant 0 : i32
    return %c0_i32, %c0_i32_0 : i32, i32
  }
  func.func @transform_8(%arg0: i32) -> (i32, i32) {
    %c0_i32 = arith.constant 0 : i32
    %c0_i32_0 = arith.constant 0 : i32
    %c0_i32_1 = arith.constant 0 : i32
    return %c0_i32, %c0_i32_0 : i32, i32
  }
  func.func @transform_9(%arg0: i32) -> (i32, i32) {
    %c0_i32 = arith.constant 0 : i32
    %c0_i32_0 = arith.constant 0 : i32
    %c0_i32_1 = arith.constant 0 : i32
    return %c0_i32, %c0_i32_0 : i32, i32
  }
  func.func @transform_10(%arg0: i32) -> (i32, i32) {
    %c0_i32 = arith.constant 0 : i32
    %c0_i32_0 = arith.constant 0 : i32
    %c0_i32_1 = arith.constant 0 : i32
    return %c0_i32, %c0_i32_0 : i32, i32
  }
  func.func @transform_11(%arg0: i32) -> (i32, i32) {
    %c0_i32 = arith.constant 0 : i32
    %c0_i32_0 = arith.constant 0 : i32
    %c0_i32_1 = arith.constant 0 : i32
    return %c0_i32, %c0_i32_0 : i32, i32
  }
  func.func @transform_12(%arg0: i32) -> (i32, i32) {
    %c0_i32 = arith.constant 0 : i32
    %c0_i32_0 = arith.constant 0 : i32
    %c0_i32_1 = arith.constant 0 : i32
    return %c0_i32, %c0_i32_0 : i32, i32
  }
}

</mosaic_0001>

<llo_original>
// kernel: tpu_custom_call.1
$region0: #{tpu_custom_call.1}
  #allocation0 [shape = 'u32[]', space=smem, size = 0x4, offset = 0x4, fixed_abs, tag = 'smem constant byte address 0x4 - core index']
  #allocation1 [shape = 'u32[144,128]{1,0:T(1,128)}', space=vmem, size = 0x12000, scoped, tag = 'internal scratch']
  %s0 = inlined_call_operand.hbm [shape: f32[8,62], index: 0, kind: input, shape index: {}]
  %s1 = inlined_call_operand.hbm [shape: f32[62,128], index: 1, kind: input, shape index: {}]
  %s2 = inlined_call_operand.vmem [shape: f32[1,128], index: 2, kind: input, shape index: {}]
  %s3 = inlined_call_operand.vmem [shape: f32[1,64], index: 3, kind: input, shape index: {}]
  %s4 = inlined_call_operand.hbm [shape: f32[64,128], index: 4, kind: input, shape index: {}]
  %s5 = inlined_call_operand.vmem [shape: f32[1,128], index: 5, kind: input, shape index: {}]
  %s6 = inlined_call_operand.vmem [shape: f32[1,128], index: 6, kind: input, shape index: {}]
  %s7 = inlined_call_operand.hbm [shape: f32[128,128], index: 7, kind: input, shape index: {}]
  %s8 = inlined_call_operand.vmem [shape: f32[1,128], index: 8, kind: input, shape index: {}]
  %s9 = inlined_call_operand.hbm [shape: f32[128,128], index: 9, kind: input, shape index: {}]
  %s10 = inlined_call_operand.vmem [shape: f32[1,128], index: 10, kind: input, shape index: {}]
  %s11 = inlined_call_operand.hbm [shape: f32[8,128], index: 11, kind: output, shape index: {0}]
  %s12 = inlined_call_operand.hbm [shape: f32[8,128], index: 12, kind: output, shape index: {1}]
  %13 = xla_tuple %s11, %s12
  %s14 = sld [smem:[#allocation0]]
  $region82: #{tpu_custom_call.1} parent=0
    _
  %s16 = ssub.s32 1, %s14
  %s17 = scalar_select 0, %s16, %s14
  $region1: #{tpu_custom_call.1} parent=0
    #allocation2 [shape = 'u8[4096]{0}', space=vmem, size = 0x1000, scoped, tag = 'input window, operand 0, single buffered']
    #allocation3 [shape = 's32[1]{0}', space=sflag, size = 0x4, scoped, tag = 'scoped memory for tpu_custom_call.1']
    #allocation4 [shape = 's32[1]{0}', space=sflag, size = 0x4, scoped, tag = 'scoped memory for tpu_custom_call.1']
    #allocation5 [shape = 'u8[32768]{0}', space=vmem, size = 0x8000, scoped, tag = 'input window, operand 1, single buffered']
    #allocation6 [shape = 's32[1]{0}', space=sflag, size = 0x4, scoped, tag = 'scoped memory for tpu_custom_call.1']
    #allocation7 [shape = 'u8[32768]{0}', space=vmem, size = 0x8000, scoped, tag = 'input window, operand 4, single buffered']
    #allocation8 [shape = 'u8[65536]{0}', space=vmem, size = 0x10000, scoped, tag = 'input window, operand 7, single buffered']
    #allocation9 [shape = 's32[1]{0}', space=sflag, size = 0x4, scoped, tag = 'scoped memory for tpu_custom_call.1']
    #allocation10 [shape = 'u8[65536]{0}', space=vmem, size = 0x10000, scoped, tag = 'input window, operand 9, single buffered']
    #allocation11 [shape = 'u8[4096]{0}', space=vmem, size = 0x1000, scoped, tag = 'output window, operand 0, single buffered']
    #allocation12 [shape = 'u8[4096]{0}', space=vmem, size = 0x1000, scoped, tag = 'output window, operand 1, single buffered']
    #allocation13 [shape = 's32[1]{0}', space=sflag, size = 0x4, scoped, tag = 'scoped memory for tpu_custom_call.1']
    %18 = vsyncpa [#allocation3], 0
    %19 = vsyncpa [#allocation6], 0
    %20 = vsyncpa [#allocation9], 0
    %21 = vsyncpa [#allocation4], 0
    %22 = vsyncpa [#allocation13], 0
    // Predicated region
    $region2: #{tpu_custom_call.1} parent=1 // pred_check
      _
    $region3: #{tpu_custom_call.1} parent=1 // pred_check_branch
      %24 = sbr.rel (0) target = $region5
    $region4: #{tpu_custom_call.1} parent=1 // pred_region
      %s26 = ssub.s32 128, 128
      %27 = vsyncadd [#allocation3], %s26
      %s29 = sshll.u32 [#allocation2], 4
      %s30 = int_to_ptr.vmem [resolvable:$true] %s29
      %32 = dma.hbm_to_vmem [thread:$0]  %s0, 128, %s30, [#allocation3]
    $region5: #{tpu_custom_call.1} parent=1 // pred_fallthru
      _
    // Predicated region
    $region6: #{tpu_custom_call.1} parent=1 // pred_check
      _
    $region7: #{tpu_custom_call.1} parent=1 // pred_check_branch
      %34 = sbr.rel (0) target = $region9
    $region8: #{tpu_custom_call.1} parent=1 // pred_region
      %s36 = ssub.s32 1024, 1024
      %37 = vsyncadd [#allocation6], %s36
      %s38 = sshll.u32 [#allocation5], 4
      %s39 = int_to_ptr.vmem [resolvable:$true] %s38
      %44 = dma.hbm_to_vmem [thread:$0]  %s1, 1024, %s39, [#allocation6], 128, 128, 8
    $region9: #{tpu_custom_call.1} parent=1 // pred_fallthru
      _
    // Predicated region
    $region10: #{tpu_custom_call.1} parent=1 // pred_check
      _
    $region11: #{tpu_custom_call.1} parent=1 // pred_check_branch
      %46 = sbr.rel (0) target = $region13
    $region12: #{tpu_custom_call.1} parent=1 // pred_region
      _
    $region13: #{tpu_custom_call.1} parent=1 // pred_fallthru
      _
    // Predicated region
    $region14: #{tpu_custom_call.1} parent=1 // pred_check
      _
    $region15: #{tpu_custom_call.1} parent=1 // pred_check_branch
      %48 = sbr.rel (0) target = $region17
    $region16: #{tpu_custom_call.1} parent=1 // pred_region
      _
    $region17: #{tpu_custom_call.1} parent=1 // pred_fallthru
      _
    // Predicated region
    $region18: #{tpu_custom_call.1} parent=1 // pred_check
      _
    $region19: #{tpu_custom_call.1} parent=1 // pred_check_branch
      %50 = sbr.rel (0) target = $region21
    $region20: #{tpu_custom_call.1} parent=1 // pred_region
      %s52 = ssub.s32 1024, 1024
      %53 = vsyncadd [#allocation6], %s52
      %s54 = sshll.u32 [#allocation7], 4
      %s55 = int_to_ptr.vmem [resolvable:$true] %s54
      %60 = dma.hbm_to_vmem [thread:$0]  %s4, 1024, %s55, [#allocation6], 128, 128, 8
    $region21: #{tpu_custom_call.1} parent=1 // pred_fallthru
      _
    // Predicated region
    $region22: #{tpu_custom_call.1} parent=1 // pred_check
      _
    $region23: #{tpu_custom_call.1} parent=1 // pred_check_branch
      %62 = sbr.rel (0) target = $region25
    $region24: #{tpu_custom_call.1} parent=1 // pred_region
      _
    $region25: #{tpu_custom_call.1} parent=1 // pred_fallthru
      _
    // Predicated region
    $region26: #{tpu_custom_call.1} parent=1 // pred_check
      _
    $region27: #{tpu_custom_call.1} parent=1 // pred_check_branch
      %64 = sbr.rel (0) target = $region29
    $region28: #{tpu_custom_call.1} parent=1 // pred_region
      _
    $region29: #{tpu_custom_call.1} parent=1 // pred_fallthru
      _
    // Predicated region
    $region30: #{tpu_custom_call.1} parent=1 // pred_check
      _
    $region31: #{tpu_custom_call.1} parent=1 // pred_check_branch
      %66 = sbr.rel (0) target = $region33
    $region32: #{tpu_custom_call.1} parent=1 // pred_region
      %s68 = ssub.s32 2048, 2048
      %69 = vsyncadd [#allocation9], %s68
      %s70 = sshll.u32 [#allocation8], 4
      %s71 = int_to_ptr.vmem [resolvable:$true] %s70
      %76 = dma.hbm_to_vmem [thread:$0]  %s7, 2048, %s71, [#allocation9], 128, 128, 8
    $region33: #{tpu_custom_call.1} parent=1 // pred_fallthru
      _
    // Predicated region
    $region34: #{tpu_custom_call.1} parent=1 // pred_check
      _
    $region35: #{tpu_custom_call.1} parent=1 // pred_check_branch
      %78 = sbr.rel (0) target = $region37
    $region36: #{tpu_custom_call.1} parent=1 // pred_region
      _
    $region37: #{tpu_custom_call.1} parent=1 // pred_fallthru
      _
    // Predicated region
    $region38: #{tpu_custom_call.1} parent=1 // pred_check
      _
    $region39: #{tpu_custom_call.1} parent=1 // pred_check_branch
      %80 = sbr.rel (0) target = $region41
    $region40: #{tpu_custom_call.1} parent=1 // pred_region
      %s82 = ssub.s32 2048, 2048
      %83 = vsyncadd [#allocation9], %s82
      %s84 = sshll.u32 [#allocation10], 4
      %s85 = int_to_ptr.vmem [resolvable:$true] %s84
      %90 = dma.hbm_to_vmem [thread:$0]  %s9, 2048, %s85, [#allocation9], 128, 128, 8
    $region41: #{tpu_custom_call.1} parent=1 // pred_fallthru
      _
    // Predicated region
    $region42: #{tpu_custom_call.1} parent=1 // pred_check
      _
    $region43: #{tpu_custom_call.1} parent=1 // pred_check_branch
      %92 = sbr.rel (0) target = $region45
    $region44: #{tpu_custom_call.1} parent=1 // pred_region
      _
    $region45: #{tpu_custom_call.1} parent=1 // pred_fallthru
      _
    // Predicated region
    $region46: #{tpu_custom_call.1} parent=1 // pred_check
      _
    $region47: #{tpu_custom_call.1} parent=1 // pred_check_branch
      %94 = sbr.rel (0) target = $region49
    $region48: #{tpu_custom_call.1} parent=1 // pred_region
      %95 = dma.done [#allocation3], 128
    $region49: #{tpu_custom_call.1} parent=1 // pred_fallthru
      _
    // Predicated region
    $region50: #{tpu_custom_call.1} parent=1 // pred_check
      _
    $region51: #{tpu_custom_call.1} parent=1 // pred_check_branch
      %97 = sbr.rel (0) target = $region53
    $region52: #{tpu_custom_call.1} parent=1 // pred_region
      %98 = dma.done [#allocation6], 1024
    $region53: #{tpu_custom_call.1} parent=1 // pred_fallthru
      _
    // Predicated region
    $region54: #{tpu_custom_call.1} parent=1 // pred_check
      _
    $region55: #{tpu_custom_call.1} parent=1 // pred_check_branch
      %100 = sbr.rel (0) target = $region57
    $region56: #{tpu_custom_call.1} parent=1 // pred_region
      %101 = dma.done [#allocation6], 1024
    $region57: #{tpu_custom_call.1} parent=1 // pred_fallthru
      _
    // Predicated region
    $region58: #{tpu_custom_call.1} parent=1 // pred_check
      _
    $region59: #{tpu_custom_call.1} parent=1 // pred_check_branch
      %103 = sbr.rel (0) target = $region61
    $region60: #{tpu_custom_call.1} parent=1 // pred_region
      %104 = dma.done [#allocation9], 2048
    $region61: #{tpu_custom_call.1} parent=1 // pred_fallthru
      _
    // Predicated region
    $region62: #{tpu_custom_call.1} parent=1 // pred_check
      _
    $region63: #{tpu_custom_call.1} parent=1 // pred_check_branch
      %106 = sbr.rel (0) target = $region65
    $region64: #{tpu_custom_call.1} parent=1 // pred_region
      %107 = dma.done [#allocation9], 2048
    $region65: #{tpu_custom_call.1} parent=1 // pred_fallthru
      _
    %v108 = vld [vmem:[#allocation2] sm:$0xff]
    %v109 = vld [vmem:[#allocation5] sm:$0xff]
    %v110 = vld [vmem:[#allocation5 + $0x8] sm:$0xff]
    %v111 = vld [vmem:[#allocation5 + $0x10] sm:$0xff]
    %v112 = vld [vmem:[#allocation5 + $0x18] sm:$0xff]
    %v113 = vld [vmem:[#allocation5 + $0x20] sm:$0xff]
    %v114 = vld [vmem:[#allocation5 + $0x28] sm:$0xff]
    %v115 = vld [vmem:[#allocation5 + $0x30] sm:$0xff]
    %v116 = vld [vmem:[#allocation5 + $0x38] sm:$0x3f]
    %v117 = vld [vmem:[%s2] sm:$0x1]
    %v119 = vlaneseq
    %v120 = vshrl.u32 %v119, 7
    %v121 = vsub.s32 0, %v120
    %v122 = vrot.slane %v117, %v121
    %vm124 = vcmask 506880
    %v126 = vsel %vm124, %v108, 0
    %vm128 = vcmask 1045504
    %v130 = vsel %vm128, %v116, 0
    %132 = vmatprep.subr.mxu0 0.0
    %133 = vmatpush1.msra.mxu0 0.0
    %134 = vmatprep.subr.mxu0 0.0
    %135 = vmatpush1.msra.mxu0 0.0
    %136 = vmatprep.subr.mxu0 0.0
    %137 = vmatpush1.msra.mxu0 0.0
    %138 = vmatprep.subr.mxu0 0.0
    %139 = vmatpush1.msra.mxu0 0.0
    %140 = vmatprep.subr.mxu0 0.0
    %141 = vmatpush1.msra.mxu0 0.0
    %142 = vmatprep.subr.mxu0 0.0
    %143 = vmatpush1.msra.mxu0 0.0
    %144 = vmatprep.subr.mxu0 0.0
    %145 = vmatpush1.msra.mxu0 0.0
    %146 = vmatprep.subr.mxu0 0.0
    %147 = vmatpush1.msra.mxu0 0.0
    %148 = vmatprep.subr.mxu0 0.0
    %149 = vmatpush1.msra.mxu0 %v130
    %150 = vmatprep.subr.mxu0 0.0
    %151 = vmatpush1.msra.mxu0 %v115
    %152 = vmatprep.subr.mxu0 0.0
    %153 = vmatpush1.msra.mxu0 %v114
    %154 = vmatprep.subr.mxu0 0.0
    %155 = vmatpush1.msra.mxu0 %v113
    %156 = vmatprep.subr.mxu0 0.0
    %157 = vmatpush1.msra.mxu0 %v112
    %158 = vmatprep.subr.mxu0 0.0
    %159 = vmatpush1.msra.mxu0 %v111
    %160 = vmatprep.subr.mxu0 0.0
    %161 = vmatpush1.msra.mxu0 %v110
    %162 = vmatprep.subr.mxu0 0.0
    %163 = vmatpush1.msra.mxu0 %v109
    %164 = vmatprep.subr.mxu0 0.0
    %165 = vmatpush2.msra.mxu0 0.0
    %166 = vmatprep.subr.mxu0 0.0
    %167 = vmatpush2.msra.mxu0 0.0
    %168 = vmatprep.subr.mxu0 0.0
    %169 = vmatpush2.msra.mxu0 0.0
    %170 = vmatprep.subr.mxu0 0.0
    %171 = vmatpush2.msra.mxu0 0.0
    %172 = vmatprep.subr.mxu0 0.0
    %173 = vmatpush2.msra.mxu0 0.0
    %174 = vmatprep.subr.mxu0 0.0
    %175 = vmatpush2.msra.mxu0 0.0
    %176 = vmatprep.subr.mxu0 0.0
    %177 = vmatpush2.msra.mxu0 0.0
    %178 = vmatprep.subr.mxu0 0.0
    %179 = vmatpush2.msra.mxu0 0.0
    %180 = vmatprep.subr.mxu0 0.0
    %181 = vmatpush2.msra.mxu0 0.0
    %182 = vmatprep.subr.mxu0 0.0
    %183 = vmatpush2.msra.mxu0 0.0
    %184 = vmatprep.subr.mxu0 0.0
    %185 = vmatpush2.msra.mxu0 0.0
    %186 = vmatprep.subr.mxu0 0.0
    %187 = vmatpush2.msra.mxu0 0.0
    %188 = vmatprep.subr.mxu0 0.0
    %189 = vmatpush2.msra.mxu0 0.0
    %190 = vmatprep.subr.mxu0 0.0
    %191 = vmatpush2.msra.mxu0 0.0
    %192 = vmatprep.subr.mxu0 0.0
    %193 = vmatpush2.msra.mxu0 0.0
    %194 = vmatprep.subr.mxu0 0.0
    %195 = vmatpush2.msra.mxu0 0.0
    %196 = vmatprep.mubr.f32.mxu0 0.0
    %197 = vmatmul.mubr.f32.gmra.mxu0 %v126
    %v198 = vpop.f32.mrf.mxu0
    %v199 = vadd.f32 %v122, %v198
    %v200 = vpop.f32.mrf.mxu0
    %201 = vdwg.mxu0
    %v202 = vmax.f32 %v199, 0.0
    %v203 = vld [vmem:[%s3] sm:$0x1]
    %v204 = vld [vmem:[#allocation7] sm:$0xff]
    %v205 = vld [vmem:[#allocation7 + $0x8] sm:$0xff]
    %v206 = vld [vmem:[#allocation7 + $0x10] sm:$0xff]
    %v207 = vld [vmem:[#allocation7 + $0x18] sm:$0xff]
    %v208 = vld [vmem:[#allocation7 + $0x20] sm:$0xff]
    %v209 = vld [vmem:[#allocation7 + $0x28] sm:$0xff]
    %v210 = vld [vmem:[#allocation7 + $0x30] sm:$0xff]
    %v211 = vld [vmem:[#allocation7 + $0x38] sm:$0xff]
    %v212 = vld [vmem:[%s5] sm:$0x1]
    %vm213 = vcmask 523264
    %v215 = vsel %vm213, %v203, 0
    %217 = vmatprep.subr.mxu0 0.0
    %218 = vmatpush1.msra.mxu0 0.0
    %219 = vmatprep.subr.mxu0 0.0
    %220 = vmatpush1.msra.mxu0 0.0
    %221 = vmatprep.subr.mxu0 0.0
    %222 = vmatpush1.msra.mxu0 0.0
    %223 = vmatprep.subr.mxu0 0.0
    %224 = vmatpush1.msra.mxu0 0.0
    %225 = vmatprep.subr.mxu0 0.0
    %226 = vmatpush1.msra.mxu0 0.0
    %227 = vmatprep.subr.mxu0 0.0
    %228 = vmatpush1.msra.mxu0 0.0
    %229 = vmatprep.subr.mxu0 0.0
    %230 = vmatpush1.msra.mxu0 0.0
    %231 = vmatprep.subr.mxu0 0.0
    %232 = vmatpush1.msra.mxu0 0.0
    %233 = vmatprep.subr.mxu0 0.0
    %234 = vmatpush1.msra.mxu0 %v211
    %235 = vmatprep.subr.mxu0 0.0
    %236 = vmatpush1.msra.mxu0 %v210
    %237 = vmatprep.subr.mxu0 0.0
    %238 = vmatpush1.msra.mxu0 %v209
    %239 = vmatprep.subr.mxu0 0.0
    %240 = vmatpush1.msra.mxu0 %v208
    %241 = vmatprep.subr.mxu0 0.0
    %242 = vmatpush1.msra.mxu0 %v207
    %243 = vmatprep.subr.mxu0 0.0
    %244 = vmatpush1.msra.mxu0 %v206
    %245 = vmatprep.subr.mxu0 0.0
    %246 = vmatpush1.msra.mxu0 %v205
    %247 = vmatprep.subr.mxu0 0.0
    %248 = vmatpush1.msra.mxu0 %v204
    %249 = vmatprep.subr.mxu0 0.0
    %250 = vmatpush2.msra.mxu0 0.0
    %251 = vmatprep.subr.mxu0 0.0
    %252 = vmatpush2.msra.mxu0 0.0
    %253 = vmatprep.subr.mxu0 0.0
    %254 = vmatpush2.msra.mxu0 0.0
    %255 = vmatprep.subr.mxu0 0.0
    %256 = vmatpush2.msra.mxu0 0.0
    %257 = vmatprep.subr.mxu0 0.0
    %258 = vmatpush2.msra.mxu0 0.0
    %259 = vmatprep.subr.mxu0 0.0
    %260 = vmatpush2.msra.mxu0 0.0
    %261 = vmatprep.subr.mxu0 0.0
    %262 = vmatpush2.msra.mxu0 0.0
    %263 = vmatprep.subr.mxu0 0.0
    %264 = vmatpush2.msra.mxu0 0.0
    %265 = vmatprep.subr.mxu0 0.0
    %266 = vmatpush2.msra.mxu0 0.0
    %267 = vmatprep.subr.mxu0 0.0
    %268 = vmatpush2.msra.mxu0 0.0
    %269 = vmatprep.subr.mxu0 0.0
    %270 = vmatpush2.msra.mxu0 0.0
    %271 = vmatprep.subr.mxu0 0.0
    %272 = vmatpush2.msra.mxu0 0.0
    %273 = vmatprep.subr.mxu0 0.0
    %274 = vmatpush2.msra.mxu0 0.0
    %275 = vmatprep.subr.mxu0 0.0
    %276 = vmatpush2.msra.mxu0 0.0
    %277 = vmatprep.subr.mxu0 0.0
    %278 = vmatpush2.msra.mxu0 0.0
    %279 = vmatprep.subr.mxu0 0.0
    %280 = vmatpush2.msra.mxu0 0.0
    %281 = vmatprep.mubr.f32.mxu0 0.0
    %282 = vmatmul.mubr.f32.gmra.mxu0 %v215
    %v283 = vpop.f32.mrf.mxu0
    %v284 = vadd.f32 %v212, %v283
    %v285 = vpop.f32.mrf.mxu0
    %286 = vdwg.mxu0
    %v287 = vlaneseq
    %v288 = vshrl.u32 %v287, 7
    %v289 = vsub.s32 0, %v288
    %v290 = vrot.slane %v284, %v289
    %v291 = vadd.f32 %v202, %v290
    %v292 = vld [vmem:[%s6] sm:$0x1]
    %v294 = vlaneseq
    %v295 = vshrl.u32 %v294, 7
    %v296 = vsub.s32 0, %v295
    %v297 = vrot.slane %v292, %v296
    %v299 = vadd.f32 %v291, %v297
    %v300 = vld [vmem:[#allocation8] sm:$0xff]
    %v301 = vld [vmem:[#allocation8 + $0x8] sm:$0xff]
    %v302 = vld [vmem:[#allocation8 + $0x10] sm:$0xff]
    %v303 = vld [vmem:[#allocation8 + $0x18] sm:$0xff]
    %v304 = vld [vmem:[#allocation8 + $0x20] sm:$0xff]
    %v305 = vld [vmem:[#allocation8 + $0x28] sm:$0xff]
    %v306 = vld [vmem:[#allocation8 + $0x30] sm:$0xff]
    %v307 = vld [vmem:[#allocation8 + $0x38] sm:$0xff]
    %v308 = vld [vmem:[#allocation8 + $0x40] sm:$0xff]
    %v309 = vld [vmem:[#allocation8 + $0x48] sm:$0xff]
    %v310 = vld [vmem:[#allocation8 + $0x50] sm:$0xff]
    %v311 = vld [vmem:[#allocation8 + $0x58] sm:$0xff]
    %v312 = vld [vmem:[#allocation8 + $0x60] sm:$0xff]
    %v313 = vld [vmem:[#allocation8 + $0x68] sm:$0xff]
    %v314 = vld [vmem:[#allocation8 + $0x70] sm:$0xff]
    %v315 = vld [vmem:[#allocation8 + $0x78] sm:$0xff]
    %v316 = vld [vmem:[%s8] sm:$0x1]
    %v318 = vlaneseq
    %v319 = vshrl.u32 %v318, 7
    %v320 = vsub.s32 0, %v319
    %v321 = vrot.slane %v316, %v320
    %323 = vmatprep.subr.mxu0 0.0
    %324 = vmatpush1.msra.mxu0 %v315
    %325 = vmatprep.subr.mxu0 0.0
    %326 = vmatpush1.msra.mxu0 %v314
    %327 = vmatprep.subr.mxu0 0.0
    %328 = vmatpush1.msra.mxu0 %v313
    %329 = vmatprep.subr.mxu0 0.0
    %330 = vmatpush1.msra.mxu0 %v312
    %331 = vmatprep.subr.mxu0 0.0
    %332 = vmatpush1.msra.mxu0 %v311
    %333 = vmatprep.subr.mxu0 0.0
    %334 = vmatpush1.msra.mxu0 %v310
    %335 = vmatprep.subr.mxu0 0.0
    %336 = vmatpush1.msra.mxu0 %v309
    %337 = vmatprep.subr.mxu0 0.0
    %338 = vmatpush1.msra.mxu0 %v308
    %339 = vmatprep.subr.mxu0 0.0
    %340 = vmatpush1.msra.mxu0 %v307
    %341 = vmatprep.subr.mxu0 0.0
    %342 = vmatpush1.msra.mxu0 %v306
    %343 = vmatprep.subr.mxu0 0.0
    %344 = vmatpush1.msra.mxu0 %v305
    %345 = vmatprep.subr.mxu0 0.0
    %346 = vmatpush1.msra.mxu0 %v304
    %347 = vmatprep.subr.mxu0 0.0
    %348 = vmatpush1.msra.mxu0 %v303
    %349 = vmatprep.subr.mxu0 0.0
    %350 = vmatpush1.msra.mxu0 %v302
    %351 = vmatprep.subr.mxu0 0.0
    %352 = vmatpush1.msra.mxu0 %v301
    %353 = vmatprep.subr.mxu0 0.0
    %354 = vmatpush1.msra.mxu0 %v300
    %355 = vmatprep.subr.mxu0 0.0
    %356 = vmatpush2.msra.mxu0 0.0
    %357 = vmatprep.subr.mxu0 0.0
    %358 = vmatpush2.msra.mxu0 0.0
    %359 = vmatprep.subr.mxu0 0.0
    %360 = vmatpush2.msra.mxu0 0.0
    %361 = vmatprep.subr.mxu0 0.0
    %362 = vmatpush2.msra.mxu0 0.0
    %363 = vmatprep.subr.mxu0 0.0
    %364 = vmatpush2.msra.mxu0 0.0
    %365 = vmatprep.subr.mxu0 0.0
    %366 = vmatpush2.msra.mxu0 0.0
    %367 = vmatprep.subr.mxu0 0.0
    %368 = vmatpush2.msra.mxu0 0.0
    %369 = vmatprep.subr.mxu0 0.0
    %370 = vmatpush2.msra.mxu0 0.0
    %371 = vmatprep.subr.mxu0 0.0
    %372 = vmatpush2.msra.mxu0 0.0
    %373 = vmatprep.subr.mxu0 0.0
    %374 = vmatpush2.msra.mxu0 0.0
    %375 = vmatprep.subr.mxu0 0.0
    %376 = vmatpush2.msra.mxu0 0.0
    %377 = vmatprep.subr.mxu0 0.0
    %378 = vmatpush2.msra.mxu0 0.0
    %379 = vmatprep.subr.mxu0 0.0
    %380 = vmatpush2.msra.mxu0 0.0
    %381 = vmatprep.subr.mxu0 0.0
    %382 = vmatpush2.msra.mxu0 0.0
    %383 = vmatprep.subr.mxu0 0.0
    %384 = vmatpush2.msra.mxu0 0.0
    %385 = vmatprep.subr.mxu0 0.0
    %386 = vmatpush2.msra.mxu0 0.0
    %387 = vmatprep.mubr.f32.mxu0 0.0
    %388 = vmatmul.mubr.f32.gmra.mxu0 %v299
    %v389 = vpop.f32.mrf.mxu0
    %v390 = vadd.f32 %v321, %v389
    %v391 = vpop.f32.mrf.mxu0
    %392 = vdwg.mxu0
    %v393 = vmax.f32 %v390, 0.0
    %v394 = vld [vmem:[#allocation10] sm:$0xff]
    %v395 = vld [vmem:[#allocation10 + $0x8] sm:$0xff]
    %v396 = vld [vmem:[#allocation10 + $0x10] sm:$0xff]
    %v397 = vld [vmem:[#allocation10 + $0x18] sm:$0xff]
    %v398 = vld [vmem:[#allocation10 + $0x20] sm:$0xff]
    %v399 = vld [vmem:[#allocation10 + $0x28] sm:$0xff]
    %v400 = vld [vmem:[#allocation10 + $0x30] sm:$0xff]
    %v401 = vld [vmem:[#allocation10 + $0x38] sm:$0xff]
    %v402 = vld [vmem:[#allocation10 + $0x40] sm:$0xff]
    %v403 = vld [vmem:[#allocation10 + $0x48] sm:$0xff]
    %v404 = vld [vmem:[#allocation10 + $0x50] sm:$0xff]
    %v405 = vld [vmem:[#allocation10 + $0x58] sm:$0xff]
    %v406 = vld [vmem:[#allocation10 + $0x60] sm:$0xff]
    %v407 = vld [vmem:[#allocation10 + $0x68] sm:$0xff]
    %v408 = vld [vmem:[#allocation10 + $0x70] sm:$0xff]
    %v409 = vld [vmem:[#allocation10 + $0x78] sm:$0xff]
    %v410 = vld [vmem:[%s10] sm:$0x1]
    %v412 = vlaneseq
    %v413 = vshrl.u32 %v412, 7
    %v414 = vsub.s32 0, %v413
    %v415 = vrot.slane %v410, %v414
    %417 = vmatprep.subr.mxu0 0.0
    %418 = vmatpush1.msra.mxu0 %v409
    %419 = vmatprep.subr.mxu0 0.0
    %420 = vmatpush1.msra.mxu0 %v408
    %421 = vmatprep.subr.mxu0 0.0
    %422 = vmatpush1.msra.mxu0 %v407
    %423 = vmatprep.subr.mxu0 0.0
    %424 = vmatpush1.msra.mxu0 %v406
    %425 = vmatprep.subr.mxu0 0.0
    %426 = vmatpush1.msra.mxu0 %v405
    %427 = vmatprep.subr.mxu0 0.0
    %428 = vmatpush1.msra.mxu0 %v404
    %429 = vmatprep.subr.mxu0 0.0
    %430 = vmatpush1.msra.mxu0 %v403
    %431 = vmatprep.subr.mxu0 0.0
    %432 = vmatpush1.msra.mxu0 %v402
    %433 = vmatprep.subr.mxu0 0.0
    %434 = vmatpush1.msra.mxu0 %v401
    %435 = vmatprep.subr.mxu0 0.0
    %436 = vmatpush1.msra.mxu0 %v400
    %437 = vmatprep.subr.mxu0 0.0
    %438 = vmatpush1.msra.mxu0 %v399
    %439 = vmatprep.subr.mxu0 0.0
    %440 = vmatpush1.msra.mxu0 %v398
    %441 = vmatprep.subr.mxu0 0.0
    %442 = vmatpush1.msra.mxu0 %v397
    %443 = vmatprep.subr.mxu0 0.0
    %444 = vmatpush1.msra.mxu0 %v396
    %445 = vmatprep.subr.mxu0 0.0
    %446 = vmatpush1.msra.mxu0 %v395
    %447 = vmatprep.subr.mxu0 0.0
    %448 = vmatpush1.msra.mxu0 %v394
    %449 = vmatprep.subr.mxu0 0.0
    %450 = vmatpush2.msra.mxu0 0.0
    %451 = vmatprep.subr.mxu0 0.0
    %452 = vmatpush2.msra.mxu0 0.0
    %453 = vmatprep.subr.mxu0 0.0
    %454 = vmatpush2.msra.mxu0 0.0
    %455 = vmatprep.subr.mxu0 0.0
    %456 = vmatpush2.msra.mxu0 0.0
    %457 = vmatprep.subr.mxu0 0.0
    %458 = vmatpush2.msra.mxu0 0.0
    %459 = vmatprep.subr.mxu0 0.0
    %460 = vmatpush2.msra.mxu0 0.0
    %461 = vmatprep.subr.mxu0 0.0
    %462 = vmatpush2.msra.mxu0 0.0
    %463 = vmatprep.subr.mxu0 0.0
    %464 = vmatpush2.msra.mxu0 0.0
    %465 = vmatprep.subr.mxu0 0.0
    %466 = vmatpush2.msra.mxu0 0.0
    %467 = vmatprep.subr.mxu0 0.0
    %468 = vmatpush2.msra.mxu0 0.0
    %469 = vmatprep.subr.mxu0 0.0
    %470 = vmatpush2.msra.mxu0 0.0
    %471 = vmatprep.subr.mxu0 0.0
    %472 = vmatpush2.msra.mxu0 0.0
    %473 = vmatprep.subr.mxu0 0.0
    %474 = vmatpush2.msra.mxu0 0.0
    %475 = vmatprep.subr.mxu0 0.0
    %476 = vmatpush2.msra.mxu0 0.0
    %477 = vmatprep.subr.mxu0 0.0
    %478 = vmatpush2.msra.mxu0 0.0
    %479 = vmatprep.subr.mxu0 0.0
    %480 = vmatpush2.msra.mxu0 0.0
    %481 = vmatprep.mubr.f32.mxu0 0.0
    %482 = vmatmul.mubr.f32.gmra.mxu0 %v393
    %v483 = vpop.f32.mrf.mxu0
    %v484 = vadd.f32 %v415, %v483
    %v485 = vpop.f32.mrf.mxu0
    %486 = vdwg.mxu0
    %487 = vst [vmem:[#allocation12] sm:$0xff] %v484
    %488 = vst [vmem:[#allocation11] sm:$0xff] %v393
    // Predicated region
    $region66: #{tpu_custom_call.1} parent=1 // pred_check
      _
    $region67: #{tpu_custom_call.1} parent=1 // pred_check_branch
      %490 = sbr.rel (0) target = $region69
    $region68: #{tpu_custom_call.1} parent=1 // pred_region
      %s492 = ssub.s32 128, 128
      %493 = vsyncadd [#allocation4], %s492
      %s495 = sshll.u32 [#allocation11], 4
      %s496 = int_to_ptr.vmem [resolvable:$true] %s495
      %498 = dma.vmem_to_hbm [thread:$0]  %s496, 128, %s11, [#allocation4]
    $region69: #{tpu_custom_call.1} parent=1 // pred_fallthru
      _
    // Predicated region
    $region70: #{tpu_custom_call.1} parent=1 // pred_check
      _
    $region71: #{tpu_custom_call.1} parent=1 // pred_check_branch
      %500 = sbr.rel (0) target = $region73
    $region72: #{tpu_custom_call.1} parent=1 // pred_region
      %s502 = ssub.s32 128, 128
      %503 = vsyncadd [#allocation13], %s502
      %s505 = sshll.u32 [#allocation12], 4
      %s506 = int_to_ptr.vmem [resolvable:$true] %s505
      %508 = dma.vmem_to_hbm [thread:$0]  %s506, 128, %s12, [#allocation13]
    $region73: #{tpu_custom_call.1} parent=1 // pred_fallthru
      _
    // Predicated region
    $region74: #{tpu_custom_call.1} parent=1 // pred_check
      _
    $region75: #{tpu_custom_call.1} parent=1 // pred_check_branch
      %510 = sbr.rel (0) target = $region77
    $region76: #{tpu_custom_call.1} parent=1 // pred_region
      %511 = dma.done [#allocation4], 128
    $region77: #{tpu_custom_call.1} parent=1 // pred_fallthru
      _
    // Predicated region
    $region78: #{tpu_custom_call.1} parent=1 // pred_check
      _
    $region79: #{tpu_custom_call.1} parent=1 // pred_check_branch
      %513 = sbr.rel (0) target = $region81
    $region80: #{tpu_custom_call.1} parent=1 // pred_region
      %514 = dma.done [#allocation13], 128
    $region81: #{tpu_custom_call.1} parent=1 // pred_fallthru
      _
    %515 = vsyncpa [#allocation3], 1
    %516 = vsyncpa [#allocation6], 1
    %517 = vsyncpa [#allocation9], 1
    %518 = vsyncpa [#allocation4], 1
    %519 = vsyncpa [#allocation13], 1

</llo_original>
